<compile_context>
chip_gen: v5e
topology: v5e:2x2
jax: 0.10.0
libtpu: 0.0.40
codegen_flags: <defaults>
</compile_context>

<pallas_src>
import jax
import jax.numpy as jnp
from jax import lax
from jax.experimental import pallas as pl
from jax.experimental.pallas import tpu as pltpu

_TN = 128                      # lane width
_TM_MAX = 8192                 # max block rows per grid step (f32: 4 MiB/block)
_VMEM_LIMIT = 48 * 1024 * 1024  # below physical VMEM on v5e/v6e (128 MiB) and v7x (64 MiB/TC)


def _sublane_tile(dtype) -> int:
    itemsize = jnp.dtype(dtype).itemsize
    return {4: 8, 2: 16, 1: 32}.get(itemsize, 8)


def _num_tensorcores() -> int:
    """2 on v7x (2 TensorCores/chip), 1 on v5e/v6e; safe fallback is 1."""
    try:
        info = pltpu.get_tpu_info()
        for attr in ("num_cores", "core_count", "num_tensorcores"):
            v = getattr(info, attr, None)
            if v:
                return max(1, min(int(v), 2))
    except Exception:
        pass
    try:
        kind = jax.devices()[0].device_kind.lower()
        if "v7" in kind:
            return 2
    except Exception:
        pass
    return 1


def _make_mse_kernel(tm, steps_per_split, rows, nb, needs_mask):
    """Kernel factory: statics (tm, steps, rows, nb, mask flag) baked in via closure."""

    def accumulate(acc_ref, vals):
        if tm % 8 == 0:
            # Pure-VALU vreg-wise fold into the (8,128) accumulator — no XLU and
            # no (tm,128) scratch traffic per step.
            acc_ref[...] += vals.reshape(tm // 8, 8, _TN).sum(axis=0)
        else:
            # Tiny full-extent block (rows < sublane tile): single sublane reduce.
            acc_ref[0:1, :] += jnp.sum(vals, axis=0, keepdims=True)

    def kernel(x_ref, t_ref, out_ref, acc_ref):
        s = pl.program_id(0)
        j = pl.program_id(1)

        @pl.when(j == 0)
        def _():
            acc_ref[...] = jnp.zeros_like(acc_ref)

        d = x_ref[...].astype(jnp.float32) - t_ref[...].astype(jnp.float32)
        sq = d * d

        if needs_mask:
            g = s * steps_per_split + j   # logical row-block index
            last = nb - 1

            @pl.when(g < last)
            def _():
                accumulate(acc_ref, sq)

            @pl.when(g >= last)
            def _():
                # Only the last real (row-partial) block and clamped overrun steps
                # can contain invalid rows. Use a select (NOT a multiply) so any
                # garbage in Pallas's boundary padding is discarded.
                row0 = g * tm
                row_ids = row0 + lax.broadcasted_iota(jnp.int32, sq.shape, 0)
                accumulate(acc_ref, jnp.where(row_ids < rows, sq, 0.0))
        else:
            accumulate(acc_ref, sq)

        @pl.when(j == steps_per_split - 1)
        def _():
            # Single XLU reduce of the (8,128) accumulator per split.
            out_ref[...] = jnp.zeros_like(out_ref) + jnp.sum(acc_ref[...])

    return kernel


def _mse_forward(x, target):
    """mean((x - target)^2) with the squared-diff reduction done in Pallas."""
    assert x.shape == target.shape, "input/target shape mismatch"
    n_elems = x.size
    itemsize = jnp.dtype(x.dtype).itemsize

    xf = x.reshape(-1)
    tf = target.reshape(-1)

    # Lane-ragged tail (< 128 elements): tiny wrapper-side sum instead of
    # jnp.pad-ing full HBM copies of both arrays.
    rem = n_elems % _TN
    n_main = n_elems - rem
    tail_sum = jnp.float32(0.0)
    if rem:
        tx = lax.slice(xf, (n_main,), (n_elems,)).astype(jnp.float32)
        tt = lax.slice(tf, (n_main,), (n_elems,)).astype(jnp.float32)
        tail_sum = jnp.sum((tx - tt) ** 2)
        if n_main == 0:
            return tail_sum / jnp.float32(n_elems)
        # TODO(synk): this aligned-prefix slice still copies ~N elements for
        # lane-ragged shapes; a fully zero-copy path would need manual flat DMA.
        xf = lax.slice(xf, (0,), (n_main,))
        tf = lax.slice(tf, (0,), (n_main,))

    rows = n_main // _TN
    x2 = xf.reshape(rows, _TN)
    t2 = tf.reshape(rows, _TN)

    # Block rows: as large as VMEM allows, rounded to the dtype's sublane tile
    # (or full extent when tiny).
    sub = _sublane_tile(x.dtype)
    tm = min(_TM_MAX, (rows // sub) * sub) if rows >= sub else rows
    nb = pl.cdiv(rows, tm)                        # total row-blocks
    n_splits = max(1, min(_num_tensorcores(), nb))  # 2 only on 2-TC chips (v7x)
    steps = pl.cdiv(nb, n_splits)                 # row-blocks handled per split
    needs_mask = (rows % tm != 0) or (nb % n_splits != 0)

    def in_map(s, j):
        # Clamp so fully-out-of-range steps of the last split stay in bounds;
        # their contribution is zeroed by the in-kernel mask.
        return (jnp.minimum(s * steps + j, nb - 1), 0)

    partials = pl.pallas_call(
        _make_mse_kernel(tm, steps, rows, nb, needs_mask),
        out_shape=jax.ShapeDtypeStruct((n_splits, 1), jnp.float32),
        grid_spec=pltpu.PrefetchScalarGridSpec(
            num_scalar_prefetch=0,
            grid=(n_splits, steps),
            in_specs=[
                pl.BlockSpec((tm, _TN), in_map),
                pl.BlockSpec((tm, _TN), in_map),
            ],
            out_specs=pl.BlockSpec((1, 1), lambda s, j: (s, 0)),
            scratch_shapes=[pltpu.VMEM((8, _TN), jnp.float32)],
        ),
        compiler_params=pltpu.CompilerParams(
            dimension_semantics=("parallel", "arbitrary"),
            vmem_limit_bytes=_VMEM_LIMIT,
        ),
        cost_estimate=pl.CostEstimate(
            flops=3 * n_main,
            transcendentals=0,
            bytes_accessed=2 * n_main * itemsize + n_splits * 4,
        ),
    )(x2, t2)

    return (jnp.sum(partials) + tail_sum) / jnp.float32(n_elems)


@jax.custom_vjp
def _mse_loss(x, target):
    return _mse_forward(x, target)


def _mse_loss_fwd(x, target):
    return _mse_forward(x, target), (x, target)


def _mse_loss_bwd(res, g):
    x, target = res
    scale = (2.0 / x.size) * g
    gx = (scale * (x.astype(jnp.float32) - target.astype(jnp.float32))).astype(x.dtype)
    return gx, jnp.zeros_like(target)  # target is detached in the module


_mse_loss.defvjp(_mse_loss_fwd, _mse_loss_bwd)

_mse_loss_jit = jax.jit(_mse_loss)


class ContentLoss:
    """Pallas/JAX port of the PyTorch ContentLoss module.

    forward(input) computes self.loss = mse_loss(input, target) via a Pallas
    reduction kernel and returns `input` unchanged (identity pass-through).
    """

    def __init__(self, target):
        # target.detach() in PyTorch -> stop_gradient here.
        self.target = jax.lax.stop_gradient(target)
        self.loss = None

    def forward(self, x):
        self.loss = _mse_loss_jit(x, self.target)
        return x

    __call__ = forward


if __name__ == "__main__":
    key = jax.random.PRNGKey(0)
    k_in, k_tgt = jax.random.split(key)

    # Small NCHW shape consistent with a conv-feature-map content loss.
    shape = (2, 4, 16, 16)
    x = jax.random.normal(k_in, shape, dtype=jnp.float32)
    target = jax.random.normal(k_tgt, shape, dtype=jnp.float32)

    module = ContentLoss(target)
    out = module(x)
    out = jax.block_until_ready(out)
    loss = jax.block_until_ready(module.loss)

    ref_loss = jnp.mean((x - target) ** 2)
    assert jnp.allclose(loss, ref_loss, rtol=1e-5, atol=1e-6), (loss, ref_loss)
    assert jnp.array_equal(out, x)

    # Extra shapes exercising the masked last block, tiny full-extent block, and
    # lane-ragged tail paths.
    for extra_shape in [(2, 4, 18, 16), (2, 3, 11, 13)]:
        ka, kb = jax.random.split(jax.random.PRNGKey(hash(extra_shape) % (2**31)))
        xa = jax.random.normal(ka, extra_shape, dtype=jnp.float32)
        ta = jax.random.normal(kb, extra_shape, dtype=jnp.float32)
        m = ContentLoss(ta)
        _ = m(xa)
        got = jax.block_until_ready(m.loss)
        ref = jnp.mean((xa - ta) ** 2)
        assert jnp.allclose(got, ref, rtol=1e-5, atol=1e-6), (extra_shape, got, ref)

    # bf16 path (16-row sublane tile, f32 accumulation in-kernel).
    kc, kd = jax.random.split(jax.random.PRNGKey(7))
    xb = jax.random.normal(kc, (4, 8, 32, 32), dtype=jnp.bfloat16)
    tb = jax.random.normal(kd, (4, 8, 32, 32), dtype=jnp.bfloat16)
    mb = ContentLoss(tb)
    _ = mb(xb)
    got_b = jax.block_until_ready(mb.loss)
    ref_b = jnp.mean((xb.astype(jnp.float32) - tb.astype(jnp.float32)) ** 2)
    assert jnp.allclose(got_b, ref_b, rtol=1e-4, atol=1e-6), (got_b, ref_b)

    print("KERNEL_OK")
</pallas_src>

<mosaic_0001>
module attributes {stable_mosaic.version = 11 : i64} {
  func.func @kernel(%arg0: i32, %arg1: i32, %arg2: memref<16x128xf32, #tpu.memory_space<vmem>>, %arg3: memref<16x128xf32, #tpu.memory_space<vmem>>, %arg4: memref<1x1xf32, #tpu.memory_space<vmem>>, %arg5: memref<8x128xf32, #tpu.memory_space<vmem>>) attributes {dimension_semantics = [#tpu.dimension_semantics<parallel>, #tpu.dimension_semantics<arbitrary>], iteration_bounds = array<i64: 1, 1>, scalar_prefetch = 0 : i64, scratch_operands = 1 : i64, tpu.core_type = #tpu.core_type<tc>, window_params = [{transform_indices = @transform_0, window_bounds = array<i64: 16, 128>}, {transform_indices = @transform_1, window_bounds = array<i64: 16, 128>}, {transform_indices = @transform_2, window_bounds = array<i64: 1, 1>}]} {
    %c0_i32 = arith.constant 0 : i32
    %0 = arith.cmpi eq, %arg1, %c0_i32 : i32
    %1 = arith.extui %0 : i1 to i32
    %c0_i32_0 = arith.constant 0 : i32
    %2 = arith.cmpi ne, %1, %c0_i32_0 : i32
    scf.if %2 {
      %cst_10 = arith.constant 0.000000e+00 : f32
      %15 = vector.broadcast %cst_10 : f32 to vector<8x128xf32>
      %c0_11 = arith.constant 0 : index
      %c0_12 = arith.constant 0 : index
      %16 = vector.load %arg5[%c0_11, %c0_12] : memref<8x128xf32, #tpu.memory_space<vmem>>, vector<8x128xf32>
      tpu.vector_store %arg5[%c0_11, %c0_12], %15 {strides = array<i32>} : memref<8x128xf32, #tpu.memory_space<vmem>>, vector<8x128xf32>,
    } else {
    }
    %c0 = arith.constant 0 : index
    %c0_1 = arith.constant 0 : index
    %3 = vector.load %arg2[%c0, %c0_1] : memref<16x128xf32, #tpu.memory_space<vmem>>, vector<16x128xf32>
    %c0_2 = arith.constant 0 : index
    %c0_3 = arith.constant 0 : index
    %4 = vector.load %arg3[%c0_2, %c0_3] : memref<16x128xf32, #tpu.memory_space<vmem>>, vector<16x128xf32>
    %5 = arith.subf %3, %4 : vector<16x128xf32>
    %6 = arith.mulf %5, %5 : vector<16x128xf32>
    %c0_4 = arith.constant 0 : index
    %c0_5 = arith.constant 0 : index
    %7 = vector.load %arg5[%c0_4, %c0_5] : memref<8x128xf32, #tpu.memory_space<vmem>>, vector<8x128xf32>
    %8 = vector.shape_cast %6 : vector<16x128xf32> to vector<2x8x128xf32>
    %cst = arith.constant dense<0.000000e+00> : vector<8x128xf32>
    %9 = vector.multi_reduction <add>, %8, %cst [0] : vector<2x8x128xf32> to vector<8x128xf32>
    %10 = arith.addf %7, %9 : vector<8x128xf32>
    %c0_6 = arith.constant 0 : index
    %c0_7 = arith.constant 0 : index
    %11 = vector.load %arg5[%c0_6, %c0_7] : memref<8x128xf32, #tpu.memory_space<vmem>>, vector<8x128xf32>
    tpu.vector_store %arg5[%c0_6, %c0_7], %10 {strides = array<i32>} : memref<8x128xf32, #tpu.memory_space<vmem>>, vector<8x128xf32>,
    %c0_i32_8 = arith.constant 0 : i32
    %12 = arith.cmpi eq, %arg1, %c0_i32_8 : i32
    %13 = arith.extui %12 : i1 to i32
    %c0_i32_9 = arith.constant 0 : i32
    %14 = arith.cmpi ne, %13, %c0_i32_9 : i32
    scf.if %14 {
      %cst_10 = arith.constant 0.000000e+00 : f32
      %15 = vector.broadcast %cst_10 : f32 to vector<1x1xf32>
      %c0_11 = arith.constant 0 : index
      %c0_12 = arith.constant 0 : index
      %16 = vector.load %arg5[%c0_11, %c0_12] : memref<8x128xf32, #tpu.memory_space<vmem>>, vector<8x128xf32>
      %17 = vector.shape_cast %16 : vector<8x128xf32> to vector<1x8x128xf32>
      %cst_13 = arith.constant dense<0.000000e+00> : vector<1xf32>
      %18 = vector.multi_reduction <add>, %17, %cst_13 [1, 2] : vector<1x8x128xf32> to vector<1xf32>
      %19 = vector.shape_cast %18 : vector<1xf32> to vector<1x1x1xf32>
      %20 = vector.extract %19[0, 0, 0] : f32 from vector<1x1x1xf32>
      %21 = vector.broadcast %20 : f32 to vector<1x1xf32>
      %22 = arith.addf %15, %21 : vector<1x1xf32>
      %c0_14 = arith.constant 0 : index
      %c0_15 = arith.constant 0 : index
      %23 = vector.load %arg4[%c0_14, %c0_15] : memref<1x1xf32, #tpu.memory_space<vmem>>, vector<1x1xf32>
      tpu.vector_store %arg4[%c0_14, %c0_15], %22 {strides = array<i32>} : memref<1x1xf32, #tpu.memory_space<vmem>>, vector<1x1xf32>,
    } else {
    }
    return
  }
  func.func @transform_0(%arg0: i32, %arg1: i32) -> (i32, i32) {
    %c1_i32 = arith.constant 1 : i32
    %0 = arith.muli %arg0, %c1_i32 : i32
    %1 = arith.addi %0, %arg1 : i32
    %c0_i32 = arith.constant 0 : i32
    %2 = arith.minsi %1, %c0_i32 : i32
    %c0_i32_0 = arith.constant 0 : i32
    %c0_i32_1 = arith.constant 0 : i32
    return %2, %c0_i32_0 : i32, i32
  }
  func.func @transform_1(%arg0: i32, %arg1: i32) -> (i32, i32) {
    %c1_i32 = arith.constant 1 : i32
    %0 = arith.muli %arg0, %c1_i32 : i32
    %1 = arith.addi %0, %arg1 : i32
    %c0_i32 = arith.constant 0 : i32
    %2 = arith.minsi %1, %c0_i32 : i32
    %c0_i32_0 = arith.constant 0 : i32
    %c0_i32_1 = arith.constant 0 : i32
    return %2, %c0_i32_0 : i32, i32
  }
  func.func @transform_2(%arg0: i32, %arg1: i32) -> (i32, i32) {
    %c0_i32 = arith.constant 0 : i32
    %c0_i32_0 = arith.constant 0 : i32
    return %arg0, %c0_i32 : i32, i32
  }
}

</mosaic_0001>

<llo_original>
// kernel: _mse_loss.1
$region0: #{_mse_loss.1}
  #allocation0 [shape = 'u32[]', space=smem, size = 0x4, offset = 0x4, fixed_abs, tag = 'smem constant byte address 0x4 - core index']
  #allocation1 [shape = 'u32[72,128]{1,0:T(1,128)}', space=vmem, size = 0x9000, scoped, tag = 'internal scratch']
  #allocation2 [shape = 'f32[8,128]{1,0:T(8,128)}', space=vmem, size = 0x1000, scoped, tag = 'scratch operand']
  %s0 = inlined_call_operand.vmem [shape: f32[16,128], index: 0, kind: input, shape index: {}]
  %s1 = inlined_call_operand.vmem [shape: f32[16,128], index: 1, kind: input, shape index: {}]
  %s2 = inlined_call_operand.hbm [shape: f32[1,1], index: 2, kind: output, shape index: {}]
  %s3 = sld [smem:[#allocation0]]
  $region26: #{_mse_loss.1} parent=0
    _
  %s5 = ssub.s32 1, %s3
  %s6 = scalar_select 0, %s5, %s3
  $region1: #{_mse_loss.1} parent=0
    #allocation3 [shape = 'u8[512]{0}', space=vmem, size = 0x400, scoped, tag = 'output window, operand 0, single buffered']
    #allocation4 [shape = 's32[1]{0}', space=sflag, size = 0x4, scoped, tag = 'scoped memory for _mse_loss.1']
    %7 = vsyncpa [#allocation4], 0
    // Predicated region
    $region2: #{_mse_loss.1} parent=1 // pred_check
      _
    $region3: #{_mse_loss.1} parent=1 // pred_check_branch
      %9 = sbr.rel (0) target = $region5
    $region4: #{_mse_loss.1} parent=1 // pred_region
      %s10 = sadd.s32 0, 0
      %p11 = scmp.lt.s32.totalorder %s10, 0
      %s12 = scalar_select %p11, %s10, 0
      %s13 = smul.u32 2, %s12
      %p14 = scmp.lt.s32.totalorder %s13, 1
      %s15 = scalar_select %p14, %s13, 1
      %s16 = smul.addr %s15, 8
      %s17 = scalar_lea.vmem %s0, %s16
      %s18 = sadd.s32 0, 0
      %p19 = scmp.lt.s32.totalorder %s18, 0
      %s20 = scalar_select %p19, %s18, 0
      %s21 = smul.u32 2, %s20
    $region5: #{_mse_loss.1} parent=1 // pred_fallthru
      _
    // Predicated region
    $region6: #{_mse_loss.1} parent=1 // pred_check
      _
    $region7: #{_mse_loss.1} parent=1 // pred_check_branch
      %23 = sbr.rel (0) target = $region9
    $region8: #{_mse_loss.1} parent=1 // pred_region
      %s24 = sadd.s32 0, 0
      %p25 = scmp.lt.s32.totalorder %s24, 0
      %s26 = scalar_select %p25, %s24, 0
      %s27 = smul.u32 2, %s26
      %p28 = scmp.lt.s32.totalorder %s27, 1
      %s29 = scalar_select %p28, %s27, 1
      %s30 = smul.addr %s29, 8
      %s31 = scalar_lea.vmem %s1, %s30
      %s32 = sadd.s32 0, 0
      %p33 = scmp.lt.s32.totalorder %s32, 0
      %s34 = scalar_select %p33, %s32, 0
      %s35 = smul.u32 2, %s34
    $region9: #{_mse_loss.1} parent=1 // pred_fallthru
      _
    %s36 = sadd.s32 0, 0
    %p37 = scmp.lt.s32.totalorder %s36, 0
    %s38 = scalar_select %p37, %s36, 0
    %s39 = smul.u32 2, %s38
    %p40 = scmp.lt.s32.totalorder %s39, 1
    %s41 = scalar_select %p40, %s39, 1
    %s42 = smul.addr %s41, 8
    %s43 = scalar_lea.vmem %s0, %s42
    %s44 = sadd.s32 0, 0
    %p45 = scmp.lt.s32.totalorder %s44, 0
    %s46 = scalar_select %p45, %s44, 0
    %s47 = smul.u32 2, %s46
    %p48 = scmp.lt.s32.totalorder %s47, 1
    %s49 = scalar_select %p48, %s47, 1
    %s50 = smul.addr %s49, 8
    %s51 = scalar_lea.vmem %s1, %s50
    %s52 = sadd.s32 0, 0
    %p53 = scmp.lt.s32.totalorder %s52, 0
    %s54 = scalar_select %p53, %s52, 0
    %s55 = smul.u32 2, %s54
    %p56 = scmp.lt.s32.totalorder %s55, 1
    %s57 = scalar_select %p56, %s55, 1
    %s58 = smul.addr %s57, 8
    %s59 = scalar_lea.vmem %s0, %s58
    %s60 = sadd.s32 0, 0
    %p61 = scmp.lt.s32.totalorder %s60, 0
    %s62 = scalar_select %p61, %s60, 0
    %s63 = smul.u32 2, %s62
    %s64 = sadd.s32 0, 0
    %p65 = scmp.lt.s32.totalorder %s64, 0
    %s66 = scalar_select %p65, %s64, 0
    %s67 = smul.u32 2, %s66
    %p68 = scmp.lt.s32.totalorder %s67, 1
    %s69 = scalar_select %p68, %s67, 1
    %s70 = smul.addr %s69, 8
    %s71 = scalar_lea.vmem %s1, %s70
    %s72 = sadd.s32 0, 0
    %p73 = scmp.lt.s32.totalorder %s72, 0
    %s74 = scalar_select %p73, %s72, 0
    %s75 = smul.u32 2, %s74
    %p76 = scmp.eq.s32.totalorder 0, 0
    // Predicated region
    $region10: #{_mse_loss.1} parent=1 // pred_check
      %p77 = pneg %p76
    $region11: #{_mse_loss.1} parent=1 // pred_check_branch
      %79 = sbr.rel (%p77) target = $region13
    $region12: #{_mse_loss.1} parent=1 // pred_region
      %80 = vst [vmem:[#allocation2] sm:$0xff] 0.0
    $region13: #{_mse_loss.1} parent=1 // pred_fallthru
      _
    %v81 = vld [vmem:[%s59] sm:$0xff]
    %v82 = vld [vmem:[%s59 + $0x8] sm:$0xff]
    %v83 = vld [vmem:[%s71] sm:$0xff]
    %v84 = vld [vmem:[%s71 + $0x8] sm:$0xff]
    %v85 = vsub.f32 %v81, %v83
    %v86 = vsub.f32 %v82, %v84
    %v87 = vmul.f32 %v85, %v85
    %v88 = vmul.f32 %v86, %v86
    %v89 = vld [vmem:[#allocation2] sm:$0xff]
    %v90 = vadd.f32 %v87, %v88
    %v91 = vadd.f32 %v89, %v90
    %92 = vst [vmem:[#allocation2] sm:$0xff] %v91
    // Predicated region
    $region14: #{_mse_loss.1} parent=1 // pred_check
      %p93 = pneg %p76
    $region15: #{_mse_loss.1} parent=1 // pred_check_branch
      %95 = sbr.rel (%p93) target = $region17
    $region16: #{_mse_loss.1} parent=1 // pred_region
      %v96 = vld [vmem:[#allocation2] sm:$0xff]
      %97 = vadd.xlane.f32.xlu0 %v96
      %v98 = vpop.xlane.xlu0 %97
      %v99 = vrot.slane %v98, 4
      %v100 = vadd.f32 %v98, %v99
      %v101 = vrot.slane %v100, 2
      %v102 = vadd.f32 %v100, %v101
      %v103 = vrot.slane %v102, 1
      %v104 = vadd.f32 %v102, %v103
      %s105 = vtos %v104
      %v106 = vstv %s105
      %v107 = vadd.f32 %v106, 0.0
      %vm108 = vcmask 0
      %109 = vst.msk [vmem:[#allocation3] sm:$0x1] %vm108, %v107
    $region17: #{_mse_loss.1} parent=1 // pred_fallthru
      _
    // Predicated region
    $region18: #{_mse_loss.1} parent=1 // pred_check
      _
    $region19: #{_mse_loss.1} parent=1 // pred_check_branch
      %111 = sbr.rel (0) target = $region21
    $region20: #{_mse_loss.1} parent=1 // pred_region
      %113 = vsyncadd [#allocation4], 0
      %s115 = sshll.u32 [#allocation3], 4
      %s116 = int_to_ptr.vmem [resolvable:$true] %s115
      %s117 = sshll.u32 %s2, 4
      %s118 = int_to_ptr.hbm [resolvable:$true] %s117
      %120 = dma.vmem_to_hbm [thread:$0]  %s116, 16, %s118, [#allocation4]
    $region21: #{_mse_loss.1} parent=1 // pred_fallthru
      _
    // Predicated region
    $region22: #{_mse_loss.1} parent=1 // pred_check
      _
    $region23: #{_mse_loss.1} parent=1 // pred_check_branch
      %122 = sbr.rel (0) target = $region25
    $region24: #{_mse_loss.1} parent=1 // pred_region
      %124 = dma.done [#allocation4], 16
    $region25: #{_mse_loss.1} parent=1 // pred_fallthru
      _
    %125 = vsyncpa [#allocation4], 1

</llo_original>
